<compile_context>
chip_gen: v7x
topology: tpu7x:2x2x1
jax: 0.10.0
libtpu: 0.0.40
codegen_flags: <defaults>
</compile_context>

<pallas_src>
import jax
import jax.numpy as jnp
from jax.experimental import pallas as pl
from jax.experimental.pallas import tpu as pltpu

# ----------------------------- problem sizes -------------------------------
B = 2        # batch
C_HALF = 16  # channels of each of query/target (cat -> 32)
C_IN = 2 * C_HALF
C_OUT = 16
L = 16       # sequence length
K = 7        # conv kernel size
L_OUT = L - K + 1
BN_EPS = 1e-5


# ------------------------------- kernel ------------------------------------
def caa_block2_kernel(q1_ref, t1_ref, q2_ref, t2_ref, wp_ref, o_ref):
    # q*/t*_ref: (B, C_HALF, L)  -- PyTorch NCL layout, used as-is.
    # wp_ref   : (C_OUT, K*C_IN + 1)  BN-fused conv weight, rows of the
    #            contraction ordered (k, c_in); bias packed in last column.
    # o_ref    : (B, C_OUT, L_OUT)    NCL layout.
    p1 = t1_ref[...] + q1_ref[...]           # (B, 16, L)  == protein1
    p2 = t2_ref[...] + q2_ref[...]           # (B, 16, L)  == protein2

    wp = wp_ref[...]                         # (C_OUT, K*C_IN + 1)
    w = wp[:, :K * C_IN]                     # (C_OUT, K*C_IN)
    bias = wp[:, K * C_IN:]                  # (C_OUT, 1) broadcasts over L_OUT

    # Statically unrolled batch loop: one im2col build + one MXU push each.
    for b in range(B):
        # channel-concat == torch.cat(dim=1): rows 0..15 = protein1, 16..31 = protein2
        x = jnp.concatenate([p1[b], p2[b]], axis=0)               # (C_IN, L)
        # im2col window matrix: row index = k*C_IN + c_in
        col = jnp.concatenate(
            [x[:, k:k + L_OUT] for k in range(K)], axis=0)        # (K*C_IN, L_OUT)
        y = jnp.dot(w, col, preferred_element_type=jnp.float32)   # (C_OUT, L_OUT)
        o_ref[b] = jnp.maximum(y + bias, 0.0).astype(o_ref.dtype)  # +bias, ReLU


# --------------------------- parameter preparation ---------------------------
def prepare_params(conv_w, conv_b, bn_gamma, bn_beta, bn_mean, bn_var):
    """Fuse eval-mode BatchNorm into the conv and pack weight+bias. Run ONCE."""
    scale = bn_gamma / jnp.sqrt(bn_var + BN_EPS)                  # (C_OUT,)
    w_fused = conv_w * scale[:, None, None]                       # (C_OUT, C_IN, K)
    b_fused = (conv_b - bn_mean) * scale + bn_beta                # (C_OUT,)
    # (C_OUT, C_IN, K) -> (C_OUT, K, C_IN) -> (C_OUT, K*C_IN); flat row = k*C_IN + ci
    w_mat = jnp.transpose(w_fused, (0, 2, 1)).reshape(C_OUT, K * C_IN)
    return jnp.concatenate([w_mat, b_fused[:, None]], axis=1)     # (C_OUT, K*C_IN+1)


# ------------------------------- wrapper ------------------------------------
@jax.jit
def caa_block2_forward(query1, target1, query2, target2, w_packed):
    """Inputs in PyTorch NCL layout: (B, 16, L). Output: (B, 16, L_OUT)."""
    vmem = pl.BlockSpec(memory_space=pltpu.MemorySpace.VMEM)
    return pl.pallas_call(
        caa_block2_kernel,
        out_shape=jax.ShapeDtypeStruct((B, C_OUT, L_OUT), jnp.float32),
        in_specs=[vmem, vmem, vmem, vmem, vmem],
        out_specs=vmem,
    )(query1, target1, query2, target2, w_packed)


# ---------------------------- pure-JAX reference -----------------------------
def caa_block2_reference(query1, target1, query2, target2,
                         conv_w, conv_b, bn_gamma, bn_beta, bn_mean, bn_var):
    protein = jnp.concatenate([target1 + query1, target2 + query2], axis=1)
    y = jax.lax.conv_general_dilated(
        protein, conv_w, window_strides=(1,), padding="VALID",
        dimension_numbers=("NCH", "OIH", "NCH"))
    y = y + conv_b[None, :, None]
    y = (y - bn_mean[None, :, None]) / jnp.sqrt(bn_var[None, :, None] + BN_EPS)
    y = y * bn_gamma[None, :, None] + bn_beta[None, :, None]
    return jnp.maximum(y, 0.0)


# --------------------------------- main --------------------------------------
if __name__ == "__main__":
    key = jax.random.PRNGKey(0)
    ks = jax.random.split(key, 10)

    # Deterministic synthetic parameters (shapes from CAA_Block2.__init__).
    conv_w = jax.random.normal(ks[0], (C_OUT, C_IN, K), jnp.float32) * 0.05
    conv_b = jax.random.normal(ks[1], (C_OUT,), jnp.float32) * 0.05
    bn_gamma = 1.0 + 0.1 * jax.random.normal(ks[2], (C_OUT,), jnp.float32)
    bn_beta = 0.1 * jax.random.normal(ks[3], (C_OUT,), jnp.float32)
    bn_mean = 0.1 * jax.random.normal(ks[4], (C_OUT,), jnp.float32)
    bn_var = 1.0 + 0.1 * jax.random.uniform(ks[5], (C_OUT,), jnp.float32)

    # Deterministic inputs (PyTorch NCL layout: (B, 16, L)).
    query1 = jax.random.normal(ks[6], (B, C_HALF, L), jnp.float32)
    target1 = jax.random.normal(ks[7], (B, C_HALF, L), jnp.float32)
    query2 = jax.random.normal(ks[8], (B, C_HALF, L), jnp.float32)
    target2 = jax.random.normal(ks[9], (B, C_HALF, L), jnp.float32)

    # BN fusion / weight packing happens once, off the per-call path.
    w_packed = jax.block_until_ready(
        prepare_params(conv_w, conv_b, bn_gamma, bn_beta, bn_mean, bn_var))

    out = caa_block2_forward(query1, target1, query2, target2, w_packed)
    out = jax.block_until_ready(out)

    ref = caa_block2_reference(query1, target1, query2, target2,
                               conv_w, conv_b, bn_gamma, bn_beta,
                               bn_mean, bn_var)
    ref = jax.block_until_ready(ref)

    assert out.shape == (B, C_OUT, L_OUT), out.shape
    assert jnp.allclose(out, ref, atol=1e-4, rtol=1e-4), \
        float(jnp.max(jnp.abs(out - ref)))
    print("KERNEL_OK")
</pallas_src>

<mosaic_0001>
module attributes {stable_mosaic.version = 11 : i64} {
  func.func @caa_block2_kernel(%arg0: memref<2x16x16xf32, #tpu.memory_space<vmem>>, %arg1: memref<2x16x16xf32, #tpu.memory_space<vmem>>, %arg2: memref<2x16x16xf32, #tpu.memory_space<vmem>>, %arg3: memref<2x16x16xf32, #tpu.memory_space<vmem>>, %arg4: memref<16x225xf32, #tpu.memory_space<vmem>>, %arg5: memref<2x16x10xf32, #tpu.memory_space<vmem>>) attributes {dimension_semantics = [], scalar_prefetch = 0 : i64, scratch_operands = 0 : i64, tpu.core_type = #tpu.core_type<tc>} {
    %c0 = arith.constant 0 : index
    %c0_0 = arith.constant 0 : index
    %c0_1 = arith.constant 0 : index
    %0 = vector.load %arg1[%c0, %c0_0, %c0_1] : memref<2x16x16xf32, #tpu.memory_space<vmem>>, vector<2x16x16xf32>
    %c0_2 = arith.constant 0 : index
    %c0_3 = arith.constant 0 : index
    %c0_4 = arith.constant 0 : index
    %1 = vector.load %arg0[%c0_2, %c0_3, %c0_4] : memref<2x16x16xf32, #tpu.memory_space<vmem>>, vector<2x16x16xf32>
    %2 = arith.addf %0, %1 : vector<2x16x16xf32>
    %c0_5 = arith.constant 0 : index
    %c0_6 = arith.constant 0 : index
    %c0_7 = arith.constant 0 : index
    %3 = vector.load %arg3[%c0_5, %c0_6, %c0_7] : memref<2x16x16xf32, #tpu.memory_space<vmem>>, vector<2x16x16xf32>
    %c0_8 = arith.constant 0 : index
    %c0_9 = arith.constant 0 : index
    %c0_10 = arith.constant 0 : index
    %4 = vector.load %arg2[%c0_8, %c0_9, %c0_10] : memref<2x16x16xf32, #tpu.memory_space<vmem>>, vector<2x16x16xf32>
    %5 = arith.addf %3, %4 : vector<2x16x16xf32>
    %c0_11 = arith.constant 0 : index
    %c0_12 = arith.constant 0 : index
    %6 = vector.load %arg4[%c0_11, %c0_12] : memref<16x225xf32, #tpu.memory_space<vmem>>, vector<16x225xf32>
    %7 = vector.extract_strided_slice %6 {offsets = [0, 0], sizes = [16, 224], strides = [1, 1]} : vector<16x225xf32> to vector<16x224xf32>
    %8 = vector.extract_strided_slice %6 {offsets = [0, 224], sizes = [16, 1], strides = [1, 1]} : vector<16x225xf32> to vector<16x1xf32>
    %9 = vector.extract_strided_slice %2 {offsets = [0, 0, 0], sizes = [1, 16, 16], strides = [1, 1, 1]} : vector<2x16x16xf32> to vector<1x16x16xf32>
    %10 = vector.shape_cast %9 : vector<1x16x16xf32> to vector<16x16xf32>
    %11 = vector.extract_strided_slice %5 {offsets = [0, 0, 0], sizes = [1, 16, 16], strides = [1, 1, 1]} : vector<2x16x16xf32> to vector<1x16x16xf32>
    %12 = vector.shape_cast %11 : vector<1x16x16xf32> to vector<16x16xf32>
    %13 = tpu.concatenate %10, %12 in 0 : vector<16x16xf32>, vector<16x16xf32> -> vector<32x16xf32>
    %14 = vector.extract_strided_slice %13 {offsets = [0, 0], sizes = [32, 10], strides = [1, 1]} : vector<32x16xf32> to vector<32x10xf32>
    %15 = vector.extract_strided_slice %13 {offsets = [0, 1], sizes = [32, 10], strides = [1, 1]} : vector<32x16xf32> to vector<32x10xf32>
    %16 = vector.extract_strided_slice %13 {offsets = [0, 2], sizes = [32, 10], strides = [1, 1]} : vector<32x16xf32> to vector<32x10xf32>
    %17 = vector.extract_strided_slice %13 {offsets = [0, 3], sizes = [32, 10], strides = [1, 1]} : vector<32x16xf32> to vector<32x10xf32>
    %18 = vector.extract_strided_slice %13 {offsets = [0, 4], sizes = [32, 10], strides = [1, 1]} : vector<32x16xf32> to vector<32x10xf32>
    %19 = vector.extract_strided_slice %13 {offsets = [0, 5], sizes = [32, 10], strides = [1, 1]} : vector<32x16xf32> to vector<32x10xf32>
    %20 = vector.extract_strided_slice %13 {offsets = [0, 6], sizes = [32, 10], strides = [1, 1]} : vector<32x16xf32> to vector<32x10xf32>
    %21 = tpu.concatenate %14, %15, %16, %17, %18, %19, %20 in 0 : vector<32x10xf32>, vector<32x10xf32>, vector<32x10xf32>, vector<32x10xf32>, vector<32x10xf32>, vector<32x10xf32>, vector<32x10xf32> -> vector<224x10xf32>
    %cst = arith.constant dense<0.000000e+00> : vector<16x10xf32>
    %22 = tpu.matmul %7, %21, %cst {dimension_numbers = #tpu.dot_dimension_numbers<[1], [0], [0], [1], [0, 0, 1, 1], [], []>} : vector<16x224xf32>, vector<224x10xf32>, vector<16x10xf32> -> vector<16x10xf32>
    %23 = vector.broadcast %8 : vector<16x1xf32> to vector<16x10xf32>
    %24 = arith.addf %22, %23 : vector<16x10xf32>
    %cst_13 = arith.constant 0.000000e+00 : f32
    %25 = vector.broadcast %cst_13 : f32 to vector<16x10xf32>
    %26 = arith.maximumf %24, %25 : vector<16x10xf32>
    %c0_14 = arith.constant 0 : index
    %c0_15 = arith.constant 0 : index
    %c0_16 = arith.constant 0 : index
    %27 = vector.load %arg5[%c0_14, %c0_15, %c0_16] : memref<2x16x10xf32, #tpu.memory_space<vmem>>, vector<1x16x10xf32>
    %28 = vector.shape_cast %27 : vector<1x16x10xf32> to vector<16x10xf32>
    %29 = vector.shape_cast %26 : vector<16x10xf32> to vector<1x16x10xf32>
    tpu.vector_store %arg5[%c0_14, %c0_15, %c0_16], %29 {strides = array<i32>} : memref<2x16x10xf32, #tpu.memory_space<vmem>>, vector<1x16x10xf32>,
    %30 = vector.extract_strided_slice %2 {offsets = [1, 0, 0], sizes = [1, 16, 16], strides = [1, 1, 1]} : vector<2x16x16xf32> to vector<1x16x16xf32>
    %31 = vector.shape_cast %30 : vector<1x16x16xf32> to vector<16x16xf32>
    %32 = vector.extract_strided_slice %5 {offsets = [1, 0, 0], sizes = [1, 16, 16], strides = [1, 1, 1]} : vector<2x16x16xf32> to vector<1x16x16xf32>
    %33 = vector.shape_cast %32 : vector<1x16x16xf32> to vector<16x16xf32>
    %34 = tpu.concatenate %31, %33 in 0 : vector<16x16xf32>, vector<16x16xf32> -> vector<32x16xf32>
    %35 = vector.extract_strided_slice %34 {offsets = [0, 0], sizes = [32, 10], strides = [1, 1]} : vector<32x16xf32> to vector<32x10xf32>
    %36 = vector.extract_strided_slice %34 {offsets = [0, 1], sizes = [32, 10], strides = [1, 1]} : vector<32x16xf32> to vector<32x10xf32>
    %37 = vector.extract_strided_slice %34 {offsets = [0, 2], sizes = [32, 10], strides = [1, 1]} : vector<32x16xf32> to vector<32x10xf32>
    %38 = vector.extract_strided_slice %34 {offsets = [0, 3], sizes = [32, 10], strides = [1, 1]} : vector<32x16xf32> to vector<32x10xf32>
    %39 = vector.extract_strided_slice %34 {offsets = [0, 4], sizes = [32, 10], strides = [1, 1]} : vector<32x16xf32> to vector<32x10xf32>
    %40 = vector.extract_strided_slice %34 {offsets = [0, 5], sizes = [32, 10], strides = [1, 1]} : vector<32x16xf32> to vector<32x10xf32>
    %41 = vector.extract_strided_slice %34 {offsets = [0, 6], sizes = [32, 10], strides = [1, 1]} : vector<32x16xf32> to vector<32x10xf32>
    %42 = tpu.concatenate %35, %36, %37, %38, %39, %40, %41 in 0 : vector<32x10xf32>, vector<32x10xf32>, vector<32x10xf32>, vector<32x10xf32>, vector<32x10xf32>, vector<32x10xf32>, vector<32x10xf32> -> vector<224x10xf32>
    %cst_17 = arith.constant dense<0.000000e+00> : vector<16x10xf32>
    %43 = tpu.matmul %7, %42, %cst_17 {dimension_numbers = #tpu.dot_dimension_numbers<[1], [0], [0], [1], [0, 0, 1, 1], [], []>} : vector<16x224xf32>, vector<224x10xf32>, vector<16x10xf32> -> vector<16x10xf32>
    %44 = vector.broadcast %8 : vector<16x1xf32> to vector<16x10xf32>
    %45 = arith.addf %43, %44 : vector<16x10xf32>
    %cst_18 = arith.constant 0.000000e+00 : f32
    %46 = vector.broadcast %cst_18 : f32 to vector<16x10xf32>
    %47 = arith.maximumf %45, %46 : vector<16x10xf32>
    %c1 = arith.constant 1 : index
    %c0_19 = arith.constant 0 : index
    %c0_20 = arith.constant 0 : index
    %48 = vector.load %arg5[%c1, %c0_19, %c0_20] : memref<2x16x10xf32, #tpu.memory_space<vmem>>, vector<1x16x10xf32>
    %49 = vector.shape_cast %48 : vector<1x16x10xf32> to vector<16x10xf32>
    %50 = vector.shape_cast %47 : vector<16x10xf32> to vector<1x16x10xf32>
    tpu.vector_store %arg5[%c1, %c0_19, %c0_20], %50 {strides = array<i32>} : memref<2x16x10xf32, #tpu.memory_space<vmem>>, vector<1x16x10xf32>,
    return
  }
}

</mosaic_0001>

<llo_original>
// kernel: caa_block2_forward.1
$region0: #{caa_block2_forward.1}
  #allocation0 [shape = 'u32[]', space=smem, size = 0x4, offset = 0x4, fixed_abs, tag = 'smem constant byte address 0x4 - core index']
  #allocation1 [shape = 'u32[144,128]{1,0:T(1,128)}', space=vmem, size = 0x12000, scoped, tag = 'internal scratch']
  %s0 = inlined_call_operand.hbm [shape: f32[2,16,16], index: 0, kind: input, shape index: {}]
  %s1 = inlined_call_operand.hbm [shape: f32[2,16,16], index: 1, kind: input, shape index: {}]
  %s2 = inlined_call_operand.hbm [shape: f32[2,16,16], index: 2, kind: input, shape index: {}]
  %s3 = inlined_call_operand.hbm [shape: f32[2,16,16], index: 3, kind: input, shape index: {}]
  %s4 = inlined_call_operand.hbm [shape: f32[16,225], index: 4, kind: input, shape index: {}]
  %s5 = inlined_call_operand.vmem [shape: f32[2,16,10], index: 5, kind: output, shape index: {}]
  %s6 = sld [smem:[#allocation0]]
  $region50: #{caa_block2_forward.1} parent=0
    _
  %s8 = ssub.s32 1, %s6
  %s9 = scalar_select 0, %s8, %s6
  $region1: #{caa_block2_forward.1} parent=0
    #allocation2 [shape = 'u8[16384]{0}', space=vmem, size = 0x4000, scoped, tag = 'input window, operand 0, single buffered']
    #allocation3 [shape = 's32[1]{0}', space=sflag, size = 0x4, scoped, tag = 'scoped memory for caa_block2_forward.1']
    #allocation4 [shape = 'u8[16384]{0}', space=vmem, size = 0x4000, scoped, tag = 'input window, operand 1, single buffered']
    #allocation5 [shape = 's32[1]{0}', space=sflag, size = 0x4, scoped, tag = 'scoped memory for caa_block2_forward.1']
    #allocation6 [shape = 'u8[16384]{0}', space=vmem, size = 0x4000, scoped, tag = 'input window, operand 2, single buffered']
    #allocation7 [shape = 'u8[16384]{0}', space=vmem, size = 0x4000, scoped, tag = 'input window, operand 3, single buffered']
    #allocation8 [shape = 's32[1]{0}', space=sflag, size = 0x4, scoped, tag = 'scoped memory for caa_block2_forward.1']
    #allocation9 [shape = 'u8[16384]{0}', space=vmem, size = 0x4000, scoped, tag = 'input window, operand 4, single buffered']
    %10 = vsyncpa [#allocation3], 0
    %11 = vsyncpa [#allocation5], 0
    %12 = vsyncpa [#allocation8], 0
    // Predicated region
    $region2: #{caa_block2_forward.1} parent=1 // pred_check
      _
    $region3: #{caa_block2_forward.1} parent=1 // pred_check_branch
      %14 = sbr.rel (0) target = $region5
    $region4: #{caa_block2_forward.1} parent=1 // pred_region
      %s16 = ssub.s32 512, 512
      %17 = vsyncadd [#allocation3], %s16
      %s18 = sshll.u32 [#allocation2], 4
      %s19 = int_to_ptr.vmem [resolvable:$true] %s18
      %24 = dma.hbm_to_vmem [thread:$0]  %s0, 512, %s19, [#allocation3], 128, 128, 8
    $region5: #{caa_block2_forward.1} parent=1 // pred_fallthru
      _
    // Predicated region
    $region6: #{caa_block2_forward.1} parent=1 // pred_check
      _
    $region7: #{caa_block2_forward.1} parent=1 // pred_check_branch
      %26 = sbr.rel (0) target = $region9
    $region8: #{caa_block2_forward.1} parent=1 // pred_region
      %s28 = ssub.s32 512, 512
      %29 = vsyncadd [#allocation5], %s28
      %s30 = sshll.u32 [#allocation4], 4
      %s31 = int_to_ptr.vmem [resolvable:$true] %s30
      %36 = dma.hbm_to_vmem [thread:$0]  %s1, 512, %s31, [#allocation5], 128, 128, 8
    $region9: #{caa_block2_forward.1} parent=1 // pred_fallthru
      _
    // Predicated region
    $region10: #{caa_block2_forward.1} parent=1 // pred_check
      _
    $region11: #{caa_block2_forward.1} parent=1 // pred_check_branch
      %38 = sbr.rel (0) target = $region13
    $region12: #{caa_block2_forward.1} parent=1 // pred_region
      %s40 = ssub.s32 512, 512
      %41 = vsyncadd [#allocation5], %s40
      %s42 = sshll.u32 [#allocation6], 4
      %s43 = int_to_ptr.vmem [resolvable:$true] %s42
      %48 = dma.hbm_to_vmem [thread:$0]  %s2, 512, %s43, [#allocation5], 128, 128, 8
    $region13: #{caa_block2_forward.1} parent=1 // pred_fallthru
      _
    // Predicated region
    $region14: #{caa_block2_forward.1} parent=1 // pred_check
      _
    $region15: #{caa_block2_forward.1} parent=1 // pred_check_branch
      %50 = sbr.rel (0) target = $region17
    $region16: #{caa_block2_forward.1} parent=1 // pred_region
      %s52 = ssub.s32 512, 512
      %53 = vsyncadd [#allocation8], %s52
      %s54 = sshll.u32 [#allocation7], 4
      %s55 = int_to_ptr.vmem [resolvable:$true] %s54
      %60 = dma.hbm_to_vmem [thread:$0]  %s3, 512, %s55, [#allocation8], 128, 128, 8
    $region17: #{caa_block2_forward.1} parent=1 // pred_fallthru
      _
    // Predicated region
    $region18: #{caa_block2_forward.1} parent=1 // pred_check
      _
    $region19: #{caa_block2_forward.1} parent=1 // pred_check_branch
      %62 = sbr.rel (0) target = $region21
    $region20: #{caa_block2_forward.1} parent=1 // pred_region
      %s64 = ssub.s32 512, 512
      %65 = vsyncadd [#allocation8], %s64
      %s66 = sshll.u32 [#allocation9], 4
      %s67 = int_to_ptr.vmem [resolvable:$true] %s66
      %72 = dma.hbm_to_vmem [thread:$0]  %s4, 512, %s67, [#allocation8], 256, 256, 16
    $region21: #{caa_block2_forward.1} parent=1 // pred_fallthru
      _
    // Predicated region
    $region22: #{caa_block2_forward.1} parent=1 // pred_check
      _
    $region23: #{caa_block2_forward.1} parent=1 // pred_check_branch
      %74 = sbr.rel (0) target = $region25
    $region24: #{caa_block2_forward.1} parent=1 // pred_region
      %75 = dma.done [#allocation3], 512
    $region25: #{caa_block2_forward.1} parent=1 // pred_fallthru
      _
    // Predicated region
    $region26: #{caa_block2_forward.1} parent=1 // pred_check
      _
    $region27: #{caa_block2_forward.1} parent=1 // pred_check_branch
      %77 = sbr.rel (0) target = $region29
    $region28: #{caa_block2_forward.1} parent=1 // pred_region
      %78 = dma.done [#allocation5], 512
    $region29: #{caa_block2_forward.1} parent=1 // pred_fallthru
      _
    // Predicated region
    $region30: #{caa_block2_forward.1} parent=1 // pred_check
      _
    $region31: #{caa_block2_forward.1} parent=1 // pred_check_branch
      %80 = sbr.rel (0) target = $region33
    $region32: #{caa_block2_forward.1} parent=1 // pred_region
      %81 = dma.done [#allocation5], 512
    $region33: #{caa_block2_forward.1} parent=1 // pred_fallthru
      _
    // Predicated region
    $region34: #{caa_block2_forward.1} parent=1 // pred_check
      _
    $region35: #{caa_block2_forward.1} parent=1 // pred_check_branch
      %83 = sbr.rel (0) target = $region37
    $region36: #{caa_block2_forward.1} parent=1 // pred_region
      %84 = dma.done [#allocation8], 512
    $region37: #{caa_block2_forward.1} parent=1 // pred_fallthru
      _
    // Predicated region
    $region38: #{caa_block2_forward.1} parent=1 // pred_check
      _
    $region39: #{caa_block2_forward.1} parent=1 // pred_check_branch
      %86 = sbr.rel (0) target = $region41
    $region40: #{caa_block2_forward.1} parent=1 // pred_region
      %87 = dma.done [#allocation8], 512
    $region41: #{caa_block2_forward.1} parent=1 // pred_fallthru
      _
    %v88 = vld [vmem:[#allocation4] sm:$0xff]
    %v89 = vld [vmem:[#allocation4 + $0x8] sm:$0xff]
    %v90 = vld [vmem:[#allocation4 + $0x10] sm:$0xff]
    %v91 = vld [vmem:[#allocation4 + $0x18] sm:$0xff]
    %v92 = vld [vmem:[#allocation2] sm:$0xff]
    %v93 = vld [vmem:[#allocation2 + $0x8] sm:$0xff]
    %v94 = vld [vmem:[#allocation2 + $0x10] sm:$0xff]
    %v95 = vld [vmem:[#allocation2 + $0x18] sm:$0xff]
    %v96 = vadd.f32 %v88, %v92
    %v97 = vadd.f32 %v89, %v93
    %v98 = vadd.f32 %v90, %v94
    %v99 = vadd.f32 %v91, %v95
    %v100 = vld [vmem:[#allocation7] sm:$0xff]
    %v101 = vld [vmem:[#allocation7 + $0x8] sm:$0xff]
    %v102 = vld [vmem:[#allocation7 + $0x10] sm:$0xff]
    %v103 = vld [vmem:[#allocation7 + $0x18] sm:$0xff]
    %v104 = vld [vmem:[#allocation6] sm:$0xff]
    %v105 = vld [vmem:[#allocation6 + $0x8] sm:$0xff]
    %v106 = vld [vmem:[#allocation6 + $0x10] sm:$0xff]
    %v107 = vld [vmem:[#allocation6 + $0x18] sm:$0xff]
    %v108 = vadd.f32 %v100, %v104
    %v109 = vadd.f32 %v101, %v105
    %v110 = vadd.f32 %v102, %v106
    %v111 = vadd.f32 %v103, %v107
    %v112 = vld [vmem:[#allocation9] sm:$0xff]
    %v113 = vld [vmem:[#allocation9 + $0x8] sm:$0xff]
    %v114 = vld [vmem:[#allocation9 + $0x10] sm:$0xff]
    %v115 = vld [vmem:[#allocation9 + $0x18] sm:$0xff]
    %120 = vrot.lane.b32.xlu0 %v96, 127
    %v121 = vpop.permute.xlu0 %120
    %122 = vrot.lane.b32.xlu0 %v97, 127
    %v123 = vpop.permute.xlu0 %122
    %124 = vrot.lane.b32.xlu0 %v108, 127
    %v125 = vpop.permute.xlu0 %124
    %126 = vrot.lane.b32.xlu0 %v109, 127
    %v127 = vpop.permute.xlu0 %126
    %132 = vrot.lane.b32.xlu0 %v96, 126
    %v133 = vpop.permute.xlu0 %132
    %134 = vrot.lane.b32.xlu0 %v97, 126
    %v135 = vpop.permute.xlu0 %134
    %136 = vrot.lane.b32.xlu0 %v108, 126
    %v137 = vpop.permute.xlu0 %136
    %138 = vrot.lane.b32.xlu0 %v109, 126
    %v139 = vpop.permute.xlu0 %138
    %144 = vrot.lane.b32.xlu0 %v96, 125
    %v145 = vpop.permute.xlu0 %144
    %146 = vrot.lane.b32.xlu0 %v97, 125
    %v147 = vpop.permute.xlu0 %146
    %148 = vrot.lane.b32.xlu0 %v108, 125
    %v149 = vpop.permute.xlu0 %148
    %150 = vrot.lane.b32.xlu0 %v109, 125
    %v151 = vpop.permute.xlu0 %150
    %156 = vrot.lane.b32.xlu0 %v96, 124
    %v157 = vpop.permute.xlu0 %156
    %158 = vrot.lane.b32.xlu0 %v97, 124
    %v159 = vpop.permute.xlu0 %158
    %160 = vrot.lane.b32.xlu0 %v108, 124
    %v161 = vpop.permute.xlu0 %160
    %162 = vrot.lane.b32.xlu0 %v109, 124
    %v163 = vpop.permute.xlu0 %162
    %168 = vrot.lane.b32.xlu0 %v96, 123
    %v169 = vpop.permute.xlu0 %168
    %170 = vrot.lane.b32.xlu0 %v97, 123
    %v171 = vpop.permute.xlu0 %170
    %172 = vrot.lane.b32.xlu0 %v108, 123
    %v173 = vpop.permute.xlu0 %172
    %174 = vrot.lane.b32.xlu0 %v109, 123
    %v175 = vpop.permute.xlu0 %174
    %180 = vrot.lane.b32.xlu0 %v96, 122
    %v181 = vpop.permute.xlu0 %180
    %182 = vrot.lane.b32.xlu0 %v97, 122
    %v183 = vpop.permute.xlu0 %182
    %184 = vrot.lane.b32.xlu0 %v108, 122
    %v185 = vpop.permute.xlu0 %184
    %186 = vrot.lane.b32.xlu0 %v109, 122
    %v187 = vpop.permute.xlu0 %186
    %193 = vset.pattern.permute.xlu0 96
    %194 = vperm.xlu0 %193, %v113
    %v195 = vpop.permute.xlu0 %194
    %198 = vset.pattern.permute.xlu0 96
    %199 = vperm.xlu0 %198, %v115
    %v200 = vpop.permute.xlu0 %199
    %vm202 = vcmask 785408
    %v203 = vsel %vm202, %v113, 0
    %v205 = vsel %vm202, %v115, 0
    %207 = vmatprep.subr.mxu0 0.0
    %208 = vmatpush1.msra.mxu0 %v96
    %209 = vmatprep.subr.mxu0 0.0
    %210 = vmatpush1.msra.mxu0 %v97
    %211 = vmatprep.subr.mxu0 0.0
    %212 = vmatpush1.msra.mxu0 %v108
    %213 = vmatprep.subr.mxu0 0.0
    %214 = vmatpush1.msra.mxu0 %v109
    %215 = vmatprep.subr.mxu0 0.0
    %216 = vmatpush1.msra.mxu0 %v121
    %217 = vmatprep.subr.mxu0 0.0
    %218 = vmatpush1.msra.mxu0 %v123
    %219 = vmatprep.subr.mxu0 0.0
    %220 = vmatpush1.msra.mxu0 %v125
    %221 = vmatprep.subr.mxu0 0.0
    %222 = vmatpush1.msra.mxu0 %v127
    %223 = vmatprep.subr.mxu0 0.0
    %224 = vmatpush1.msra.mxu0 %v133
    %225 = vmatprep.subr.mxu0 0.0
    %226 = vmatpush1.msra.mxu0 %v135
    %227 = vmatprep.subr.mxu0 0.0
    %228 = vmatpush1.msra.mxu0 %v137
    %229 = vmatprep.subr.mxu0 0.0
    %230 = vmatpush1.msra.mxu0 %v139
    %231 = vmatprep.subr.mxu0 0.0
    %232 = vmatpush1.msra.mxu0 %v145
    %233 = vmatprep.subr.mxu0 0.0
    %234 = vmatpush1.msra.mxu0 %v147
    %235 = vmatprep.subr.mxu0 0.0
    %236 = vmatpush1.msra.mxu0 %v149
    %237 = vmatprep.subr.mxu0 0.0
    %238 = vmatpush1.msra.mxu0 %v151
    %239 = vmatprep.subr.mxu0 0.0
    %240 = vmatpush1.msra.mxu0 %v157
    %241 = vmatprep.subr.mxu0 0.0
    %242 = vmatpush1.msra.mxu0 %v159
    %243 = vmatprep.subr.mxu0 0.0
    %244 = vmatpush1.msra.mxu0 %v161
    %245 = vmatprep.subr.mxu0 0.0
    %246 = vmatpush1.msra.mxu0 %v163
    %247 = vmatprep.subr.mxu0 0.0
    %248 = vmatpush1.msra.mxu0 %v169
    %249 = vmatprep.subr.mxu0 0.0
    %250 = vmatpush1.msra.mxu0 %v171
    %251 = vmatprep.subr.mxu0 0.0
    %252 = vmatpush1.msra.mxu0 %v173
    %253 = vmatprep.subr.mxu0 0.0
    %254 = vmatpush1.msra.mxu0 %v175
    %255 = vmatprep.subr.mxu0 0.0
    %256 = vmatpush1.msra.mxu0 %v181
    %257 = vmatprep.subr.mxu0 0.0
    %258 = vmatpush1.msra.mxu0 %v183
    %259 = vmatprep.subr.mxu0 0.0
    %260 = vmatpush1.msra.mxu0 %v185
    %261 = vmatprep.subr.mxu0 0.0
    %262 = vmatpush1.msra.mxu0 %v187
    %263 = vmatprep.subr.mxu0 0.0
    %264 = vmatpush1.msra.mxu0 0.0
    %265 = vmatprep.subr.mxu0 0.0
    %266 = vmatpush1.msra.mxu0 0.0
    %267 = vmatprep.subr.mxu0 0.0
    %268 = vmatpush1.msra.mxu0 0.0
    %269 = vmatprep.subr.mxu0 0.0
    %270 = vmatpush1.msra.mxu0 0.0
    %271 = vmatprep.mubr.f32.mxu0 %v203
    %272 = vmatmul.mubr.f32.gmra.mrb[0].mxu0 %v112
    %v273 = vpop.f32.mrb[0].mxu0
    %v274 = vadd.f32 %v195, %v273
    %v275 = vpop.f32.mrb[0].mxu0
    %276 = vmatprep.mubr.f32.mxu0 %v205
    %277 = vmatmul.mubr.f32.gmra.mrb[0].mxu0 %v114
    %v278 = vpop.f32.mrb[0].mxu0
    %v279 = vadd.f32 %v200, %v278
    %v280 = vpop.f32.mrb[0].mxu0
    %281 = vdwg.mxu0
    %v282 = vmax.f32 %v274, 0.0
    %v283 = vmax.f32 %v279, 0.0
    %vm284 = vcmask 80896
    %285 = vst.msk [vmem:[%s5] sm:$0xff] %vm284, %v282
    %286 = vst.msk [vmem:[%s5 + $0x8] sm:$0xff] %vm284, %v283
    %291 = vrot.lane.b32.xlu0 %v98, 127
    %v292 = vpop.permute.xlu0 %291
    %293 = vrot.lane.b32.xlu0 %v99, 127
    %v294 = vpop.permute.xlu0 %293
    %295 = vrot.lane.b32.xlu0 %v110, 127
    %v296 = vpop.permute.xlu0 %295
    %297 = vrot.lane.b32.xlu0 %v111, 127
    %v298 = vpop.permute.xlu0 %297
    %303 = vrot.lane.b32.xlu0 %v98, 126
    %v304 = vpop.permute.xlu0 %303
    %305 = vrot.lane.b32.xlu0 %v99, 126
    %v306 = vpop.permute.xlu0 %305
    %307 = vrot.lane.b32.xlu0 %v110, 126
    %v308 = vpop.permute.xlu0 %307
    %309 = vrot.lane.b32.xlu0 %v111, 126
    %v310 = vpop.permute.xlu0 %309
    %315 = vrot.lane.b32.xlu0 %v98, 125
    %v316 = vpop.permute.xlu0 %315
    %317 = vrot.lane.b32.xlu0 %v99, 125
    %v318 = vpop.permute.xlu0 %317
    %319 = vrot.lane.b32.xlu0 %v110, 125
    %v320 = vpop.permute.xlu0 %319
    %321 = vrot.lane.b32.xlu0 %v111, 125
    %v322 = vpop.permute.xlu0 %321
    %327 = vrot.lane.b32.xlu0 %v98, 124
    %v328 = vpop.permute.xlu0 %327
    %329 = vrot.lane.b32.xlu0 %v99, 124
    %v330 = vpop.permute.xlu0 %329
    %331 = vrot.lane.b32.xlu0 %v110, 124
    %v332 = vpop.permute.xlu0 %331
    %333 = vrot.lane.b32.xlu0 %v111, 124
    %v334 = vpop.permute.xlu0 %333
    %339 = vrot.lane.b32.xlu0 %v98, 123
    %v340 = vpop.permute.xlu0 %339
    %341 = vrot.lane.b32.xlu0 %v99, 123
    %v342 = vpop.permute.xlu0 %341
    %343 = vrot.lane.b32.xlu0 %v110, 123
    %v344 = vpop.permute.xlu0 %343
    %345 = vrot.lane.b32.xlu0 %v111, 123
    %v346 = vpop.permute.xlu0 %345
    %351 = vrot.lane.b32.xlu0 %v98, 122
    %v352 = vpop.permute.xlu0 %351
    %353 = vrot.lane.b32.xlu0 %v99, 122
    %v354 = vpop.permute.xlu0 %353
    %355 = vrot.lane.b32.xlu0 %v110, 122
    %v356 = vpop.permute.xlu0 %355
    %357 = vrot.lane.b32.xlu0 %v111, 122
    %v358 = vpop.permute.xlu0 %357
    %363 = vmatprep.subr.mxu0 0.0
    %364 = vmatpush1.msra.mxu0 %v98
    %365 = vmatprep.subr.mxu0 0.0
    %366 = vmatpush1.msra.mxu0 %v99
    %367 = vmatprep.subr.mxu0 0.0
    %368 = vmatpush1.msra.mxu0 %v110
    %369 = vmatprep.subr.mxu0 0.0
    %370 = vmatpush1.msra.mxu0 %v111
    %371 = vmatprep.subr.mxu0 0.0
    %372 = vmatpush1.msra.mxu0 %v292
    %373 = vmatprep.subr.mxu0 0.0
    %374 = vmatpush1.msra.mxu0 %v294
    %375 = vmatprep.subr.mxu0 0.0
    %376 = vmatpush1.msra.mxu0 %v296
    %377 = vmatprep.subr.mxu0 0.0
    %378 = vmatpush1.msra.mxu0 %v298
    %379 = vmatprep.subr.mxu0 0.0
    %380 = vmatpush1.msra.mxu0 %v304
    %381 = vmatprep.subr.mxu0 0.0
    %382 = vmatpush1.msra.mxu0 %v306
    %383 = vmatprep.subr.mxu0 0.0
    %384 = vmatpush1.msra.mxu0 %v308
    %385 = vmatprep.subr.mxu0 0.0
    %386 = vmatpush1.msra.mxu0 %v310
    %387 = vmatprep.subr.mxu0 0.0
    %388 = vmatpush1.msra.mxu0 %v316
    %389 = vmatprep.subr.mxu0 0.0
    %390 = vmatpush1.msra.mxu0 %v318
    %391 = vmatprep.subr.mxu0 0.0
    %392 = vmatpush1.msra.mxu0 %v320
    %393 = vmatprep.subr.mxu0 0.0
    %394 = vmatpush1.msra.mxu0 %v322
    %395 = vmatprep.subr.mxu0 0.0
    %396 = vmatpush1.msra.mxu0 %v328
    %397 = vmatprep.subr.mxu0 0.0
    %398 = vmatpush1.msra.mxu0 %v330
    %399 = vmatprep.subr.mxu0 0.0
    %400 = vmatpush1.msra.mxu0 %v332
    %401 = vmatprep.subr.mxu0 0.0
    %402 = vmatpush1.msra.mxu0 %v334
    %403 = vmatprep.subr.mxu0 0.0
    %404 = vmatpush1.msra.mxu0 %v340
    %405 = vmatprep.subr.mxu0 0.0
    %406 = vmatpush1.msra.mxu0 %v342
    %407 = vmatprep.subr.mxu0 0.0
    %408 = vmatpush1.msra.mxu0 %v344
    %409 = vmatprep.subr.mxu0 0.0
    %410 = vmatpush1.msra.mxu0 %v346
    %411 = vmatprep.subr.mxu0 0.0
    %412 = vmatpush1.msra.mxu0 %v352
    %413 = vmatprep.subr.mxu0 0.0
    %414 = vmatpush1.msra.mxu0 %v354
    %415 = vmatprep.subr.mxu0 0.0
    %416 = vmatpush1.msra.mxu0 %v356
    %417 = vmatprep.subr.mxu0 0.0
    %418 = vmatpush1.msra.mxu0 %v358
    %419 = vmatprep.subr.mxu0 0.0
    %420 = vmatpush1.msra.mxu0 0.0
    %421 = vmatprep.subr.mxu0 0.0
    %422 = vmatpush1.msra.mxu0 0.0
    %423 = vmatprep.subr.mxu0 0.0
    %424 = vmatpush1.msra.mxu0 0.0
    %425 = vmatprep.subr.mxu0 0.0
    %426 = vmatpush1.msra.mxu0 0.0
    %427 = vmatprep.mubr.f32.mxu0 %v203
    %428 = vmatmul.mubr.f32.gmra.mrb[0].mxu0 %v112
    %v429 = vpop.f32.mrb[0].mxu0
    %v430 = vadd.f32 %v195, %v429
    %v431 = vpop.f32.mrb[0].mxu0
    %432 = vmatprep.mubr.f32.mxu0 %v205
    %433 = vmatmul.mubr.f32.gmra.mrb[0].mxu0 %v114
    %v434 = vpop.f32.mrb[0].mxu0
    %v435 = vadd.f32 %v200, %v434
    %v436 = vpop.f32.mrb[0].mxu0
    %437 = vdwg.mxu0
    %v438 = vmax.f32 %v430, 0.0
    %v439 = vmax.f32 %v435, 0.0
    %s440 = scalar_lea.vmem %s5, 16
    %441 = vst.msk [vmem:[%s440] sm:$0xff] %vm284, %v438
    %442 = vst.msk [vmem:[%s440 + $0x8] sm:$0xff] %vm284, %v439
    // Predicated region
    $region42: #{caa_block2_forward.1} parent=1 // pred_check
      _
    $region43: #{caa_block2_forward.1} parent=1 // pred_check_branch
      %444 = sbr.rel (0) target = $region45
    $region44: #{caa_block2_forward.1} parent=1 // pred_region
      _
    $region45: #{caa_block2_forward.1} parent=1 // pred_fallthru
      _
    // Predicated region
    $region46: #{caa_block2_forward.1} parent=1 // pred_check
      _
    $region47: #{caa_block2_forward.1} parent=1 // pred_check_branch
      %446 = sbr.rel (0) target = $region49
    $region48: #{caa_block2_forward.1} parent=1 // pred_region
      _
    $region49: #{caa_block2_forward.1} parent=1 // pred_fallthru
      _
    %447 = vsyncpa [#allocation3], 1
    %448 = vsyncpa [#allocation5], 1
    %449 = vsyncpa [#allocation8], 1

</llo_original>
